<compile_context>
chip_gen: v5e
topology: v5e:2x2
jax: 0.10.0
libtpu: 0.0.40
codegen_flags: <defaults>
</compile_context>

<pallas_src>
import functools

import jax
import jax.numpy as jnp
from jax.experimental import pallas as pl
from jax.experimental.pallas import tpu as pltpu

_LANE = 128
_SUBLANE = 8


def _round_up(n, m):
    return ((n + m - 1) // m) * m


def mlp_kernel(x_ref, w1_ref, b1_ref, w2_ref, b2_ref, o_ref):
    # fc1: (tb, In) @ (In, H_p) with f32 accumulation on the MXU.
    h = jnp.dot(x_ref[...], w1_ref[...], preferred_element_type=jnp.float32)
    # Bias + ReLU epilogue stays in f32 (v5e has no bf16 VPU; free elsewhere).
    h = jnp.maximum(h + b1_ref[...], 0.0)
    # Only insert a cast if a mixed-precision (e.g. bf16 weight) path is used.
    if h.dtype != w2_ref.dtype:
        h = h.astype(w2_ref.dtype)
    # fc2: compute at the lane-padded width Out_p on the MXU ...
    out = jnp.dot(h, w2_ref[...], preferred_element_type=jnp.float32)
    # ... but store only the real Out columns: o_ref's last dim is the
    # unpadded output size, so HBM writeback is Out-wide, not 128-wide.
    out_n = o_ref.shape[-1]
    o_ref[...] = (out[:, :out_n] + b2_ref[...]).astype(o_ref.dtype)


@functools.partial(jax.jit, static_argnames=("tile_b",))
def neural_net_forward(x, w1, b1, w2, b2, *, tile_b=4096):
    """Fused NeuralNet.forward: relu(x @ w1 + b1) @ w2 + b2.

    x: (B, In); w1: (In, H); b1: (H,); w2: (H, Out); b2: (Out,).
    Weights are the transpose of the PyTorch nn.Linear layout.
    """
    B, In = x.shape
    H = w1.shape[1]
    Out = w2.shape[1]
    dtype = x.dtype

    # Lane-dense padding of the *compute* feature dims only. Padded hidden
    # columns are exactly 0 after ReLU (b1 padding is 0) and padded w2 rows
    # are 0, so the real output columns are unchanged. The HBM output array
    # itself stays unpadded at (B, Out).
    H_p = _round_up(H, _LANE)
    Out_p = _round_up(Out, _LANE)

    # Batch tile: multiple of 8 sublanes, capped at tile_b. No jnp.pad of x:
    # the last (ragged) block is clipped by Pallas; rows are independent so
    # the garbage rows read there never affect in-bounds rows, and their
    # out-of-bounds writes are dropped.
    tb = min(tile_b, _round_up(B, _SUBLANE))

    # One-off tiny pads on the (VMEM-resident) weights/biases only.
    w1_p = jnp.pad(w1, ((0, 0), (0, H_p - H)))
    b1_p = jnp.pad(b1, (0, H_p - H)).reshape(1, H_p)
    w2_p = jnp.pad(w2, ((0, H_p - H), (0, Out_p - Out)))
    b2_r = b2.reshape(1, Out)

    # VMEM budget (tightest generation is v7x at 64 MiB):
    #   - x/out tiles, double-buffered by the pipeline (counted once here),
    #   - weights/biases (default pipeline still allocates 2 buffers),
    #   - single f32 hidden + padded-fc2 compute temporaries,
    #   - a few MiB of slack for compiler-internal scratch.
    itemsize = jnp.dtype(dtype).itemsize
    act_bytes = 2 * tb * (In + Out) * itemsize
    wgt_bytes = 2 * (In * H_p + H_p * Out_p + H_p + Out) * itemsize
    hid_bytes = tb * (H_p + Out_p) * 4
    vmem_limit = int(min(48 << 20,
                         max(8 << 20,
                             act_bytes + wgt_bytes + hid_bytes + (4 << 20))))

    grid = (pl.cdiv(B, tb),)

    out = pl.pallas_call(
        mlp_kernel,
        out_shape=jax.ShapeDtypeStruct((B, Out), dtype),
        grid=grid,
        in_specs=[
            # Activations tiled over batch: tile i+1 is prefetched while
            # computing tile i.
            pl.BlockSpec((tb, In), lambda i: (i, 0)),
            # Weights / biases: constant index map -> VMEM-resident across grid.
            pl.BlockSpec((In, H_p), lambda i: (0, 0)),
            pl.BlockSpec((1, H_p), lambda i: (0, 0)),
            pl.BlockSpec((H_p, Out_p), lambda i: (0, 0)),
            pl.BlockSpec((1, Out), lambda i: (0, 0)),
        ],
        # Unpadded output block: (tb, Out) with Out equal to the full last dim.
        out_specs=pl.BlockSpec((tb, Out), lambda i: (i, 0)),
        compiler_params=pltpu.CompilerParams(
            # Batch tiles are independent -> shard across TensorCores (v7x).
            dimension_semantics=("parallel",),
            vmem_limit_bytes=vmem_limit,
        ),
    )(x, w1_p, b1_p, w2_p, b2_r)

    return out


if __name__ == "__main__":
    # Small synthetic shapes consistent with the module:
    #   input_size = 32 (bag-of-words length), hidden_size = 8, output_size = 4.
    batch, input_size, hidden_size, output_size = 2, 32, 8, 4

    key = jax.random.PRNGKey(0)
    kx, kw1, kb1, kw2, kb2 = jax.random.split(key, 5)

    x = jax.random.normal(kx, (batch, input_size), dtype=jnp.float32)

    # Deterministic parameter init (PyTorch-like uniform bounds: 1/sqrt(fan_in)).
    bound1 = 1.0 / (input_size ** 0.5)
    w1 = jax.random.uniform(kw1, (input_size, hidden_size), jnp.float32,
                            -bound1, bound1)
    b1 = jax.random.uniform(kb1, (hidden_size,), jnp.float32, -bound1, bound1)

    bound2 = 1.0 / (hidden_size ** 0.5)
    w2 = jax.random.uniform(kw2, (hidden_size, output_size), jnp.float32,
                            -bound2, bound2)
    b2 = jax.random.uniform(kb2, (output_size,), jnp.float32, -bound2, bound2)

    out = neural_net_forward(x, w1, b1, w2, b2)
    jax.block_until_ready(out)

    # Pure-JAX reference check.
    ref = jnp.maximum(x @ w1 + b1, 0.0) @ w2 + b2
    assert out.shape == (batch, output_size)
    assert jnp.allclose(out, ref, atol=1e-5, rtol=1e-5)

    print("KERNEL_OK")
</pallas_src>

<mosaic_0001>
module attributes {stable_mosaic.version = 11 : i64} {
  func.func @mlp_kernel(%arg0: i32, %arg1: memref<8x32xf32, #tpu.memory_space<vmem>>, %arg2: memref<32x128xf32, #tpu.memory_space<vmem>>, %arg3: memref<1x128xf32, #tpu.memory_space<vmem>>, %arg4: memref<128x128xf32, #tpu.memory_space<vmem>>, %arg5: memref<1x4xf32, #tpu.memory_space<vmem>>, %arg6: memref<8x4xf32, #tpu.memory_space<vmem>>) attributes {dimension_semantics = [#tpu.dimension_semantics<parallel>], iteration_bounds = array<i64: 1>, scalar_prefetch = 0 : i64, scratch_operands = 0 : i64, tpu.core_type = #tpu.core_type<tc>, window_params = [{transform_indices = @transform_0, window_bounds = array<i64: 8, 32>}, {pipeline_mode = #tpu.pipeline_mode<synchronous>, transform_indices = @transform_1, window_bounds = array<i64: 32, 128>}, {pipeline_mode = #tpu.pipeline_mode<synchronous>, transform_indices = @transform_2, window_bounds = array<i64: 1, 128>}, {pipeline_mode = #tpu.pipeline_mode<synchronous>, transform_indices = @transform_3, window_bounds = array<i64: 128, 128>}, {pipeline_mode = #tpu.pipeline_mode<synchronous>, transform_indices = @transform_4, window_bounds = array<i64: 1, 4>}, {transform_indices = @transform_5, window_bounds = array<i64: 8, 4>}]} {
    %c0 = arith.constant 0 : index
    %c0_0 = arith.constant 0 : index
    %0 = vector.load %arg1[%c0, %c0_0] : memref<8x32xf32, #tpu.memory_space<vmem>>, vector<8x32xf32>
    %c0_1 = arith.constant 0 : index
    %c0_2 = arith.constant 0 : index
    %1 = vector.load %arg2[%c0_1, %c0_2] : memref<32x128xf32, #tpu.memory_space<vmem>>, vector<32x128xf32>
    %cst = arith.constant dense<0.000000e+00> : vector<8x128xf32>
    %2 = tpu.matmul %0, %1, %cst {dimension_numbers = #tpu.dot_dimension_numbers<[1], [0], [0], [1], [0, 0, 1, 1], [], []>} : vector<8x32xf32>, vector<32x128xf32>, vector<8x128xf32> -> vector<8x128xf32>
    %c0_3 = arith.constant 0 : index
    %c0_4 = arith.constant 0 : index
    %3 = vector.load %arg3[%c0_3, %c0_4] : memref<1x128xf32, #tpu.memory_space<vmem>>, vector<1x128xf32>
    %4 = vector.broadcast %3 : vector<1x128xf32> to vector<8x128xf32>
    %5 = arith.addf %2, %4 : vector<8x128xf32>
    %cst_5 = arith.constant 0.000000e+00 : f32
    %6 = vector.broadcast %cst_5 : f32 to vector<8x128xf32>
    %7 = arith.maximumf %5, %6 : vector<8x128xf32>
    %c0_6 = arith.constant 0 : index
    %c0_7 = arith.constant 0 : index
    %8 = vector.load %arg4[%c0_6, %c0_7] : memref<128x128xf32, #tpu.memory_space<vmem>>, vector<128x128xf32>
    %cst_8 = arith.constant dense<0.000000e+00> : vector<8x128xf32>
    %9 = tpu.matmul %7, %8, %cst_8 {dimension_numbers = #tpu.dot_dimension_numbers<[1], [0], [0], [1], [0, 0, 1, 1], [], []>} : vector<8x128xf32>, vector<128x128xf32>, vector<8x128xf32> -> vector<8x128xf32>
    %10 = vector.extract_strided_slice %9 {offsets = [0, 0], sizes = [8, 4], strides = [1, 1]} : vector<8x128xf32> to vector<8x4xf32>
    %c0_9 = arith.constant 0 : index
    %c0_10 = arith.constant 0 : index
    %11 = vector.load %arg5[%c0_9, %c0_10] : memref<1x4xf32, #tpu.memory_space<vmem>>, vector<1x4xf32>
    %12 = vector.broadcast %11 : vector<1x4xf32> to vector<8x4xf32>
    %13 = arith.addf %10, %12 : vector<8x4xf32>
    %c0_11 = arith.constant 0 : index
    %c0_12 = arith.constant 0 : index
    %14 = vector.load %arg6[%c0_11, %c0_12] : memref<8x4xf32, #tpu.memory_space<vmem>>, vector<8x4xf32>
    tpu.vector_store %arg6[%c0_11, %c0_12], %13 {strides = array<i32>} : memref<8x4xf32, #tpu.memory_space<vmem>>, vector<8x4xf32>,
    return
  }
  func.func @transform_0(%arg0: i32) -> (i32, i32) {
    %c0_i32 = arith.constant 0 : i32
    %c0_i32_0 = arith.constant 0 : i32
    return %arg0, %c0_i32 : i32, i32
  }
  func.func @transform_1(%arg0: i32) -> (i32, i32) {
    %c0_i32 = arith.constant 0 : i32
    %c0_i32_0 = arith.constant 0 : i32
    %c0_i32_1 = arith.constant 0 : i32
    return %c0_i32, %c0_i32_0 : i32, i32
  }
  func.func @transform_2(%arg0: i32) -> (i32, i32) {
    %c0_i32 = arith.constant 0 : i32
    %c0_i32_0 = arith.constant 0 : i32
    %c0_i32_1 = arith.constant 0 : i32
    return %c0_i32, %c0_i32_0 : i32, i32
  }
  func.func @transform_3(%arg0: i32) -> (i32, i32) {
    %c0_i32 = arith.constant 0 : i32
    %c0_i32_0 = arith.constant 0 : i32
    %c0_i32_1 = arith.constant 0 : i32
    return %c0_i32, %c0_i32_0 : i32, i32
  }
  func.func @transform_4(%arg0: i32) -> (i32, i32) {
    %c0_i32 = arith.constant 0 : i32
    %c0_i32_0 = arith.constant 0 : i32
    %c0_i32_1 = arith.constant 0 : i32
    return %c0_i32, %c0_i32_0 : i32, i32
  }
  func.func @transform_5(%arg0: i32) -> (i32, i32) {
    %c0_i32 = arith.constant 0 : i32
    %c0_i32_0 = arith.constant 0 : i32
    return %arg0, %c0_i32 : i32, i32
  }
}

</mosaic_0001>

<llo_original>
// kernel: neural_net_forward.1
$region0: #{neural_net_forward.1}
  #allocation0 [shape = 'u32[]', space=smem, size = 0x4, offset = 0x4, fixed_abs, tag = 'smem constant byte address 0x4 - core index']
  #allocation1 [shape = 'u32[72,128]{1,0:T(1,128)}', space=vmem, size = 0x9000, scoped, tag = 'internal scratch']
  %s0 = inlined_call_operand.vmem [shape: f32[2,32], index: 0, kind: input, shape index: {}]
  %s1 = inlined_call_operand.vmem [shape: f32[32,128], index: 1, kind: input, shape index: {}]
  %s2 = inlined_call_operand.vmem [shape: f32[1,128], index: 2, kind: input, shape index: {}]
  %s3 = inlined_call_operand.vmem [shape: f32[128,128], index: 3, kind: input, shape index: {}]
  %s4 = inlined_call_operand.vmem [shape: f32[1,4], index: 4, kind: input, shape index: {}]
  %s5 = inlined_call_operand.hbm [shape: f32[2,4], index: 5, kind: output, shape index: {}]
  %s6 = sld [smem:[#allocation0]]
  $region30: #{neural_net_forward.1} parent=0
    _
  %s8 = ssub.s32 1, %s6
  %s9 = scalar_select 0, %s8, %s6
  $region1: #{neural_net_forward.1} parent=0
    #allocation2 [shape = 'u8[4096]{0}', space=vmem, size = 0x1000, scoped, tag = 'output window, operand 0, single buffered']
    #allocation3 [shape = 's32[1]{0}', space=sflag, size = 0x4, scoped, tag = 'scoped memory for neural_net_forward.1']
    %10 = vsyncpa [#allocation3], 0
    // Predicated region
    $region2: #{neural_net_forward.1} parent=1 // pred_check
      _
    $region3: #{neural_net_forward.1} parent=1 // pred_check_branch
      %12 = sbr.rel (0) target = $region5
    $region4: #{neural_net_forward.1} parent=1 // pred_region
      _
    $region5: #{neural_net_forward.1} parent=1 // pred_fallthru
      _
    // Predicated region
    $region6: #{neural_net_forward.1} parent=1 // pred_check
      _
    $region7: #{neural_net_forward.1} parent=1 // pred_check_branch
      %14 = sbr.rel (0) target = $region9
    $region8: #{neural_net_forward.1} parent=1 // pred_region
      _
    $region9: #{neural_net_forward.1} parent=1 // pred_fallthru
      _
    // Predicated region
    $region10: #{neural_net_forward.1} parent=1 // pred_check
      _
    $region11: #{neural_net_forward.1} parent=1 // pred_check_branch
      %16 = sbr.rel (0) target = $region13
    $region12: #{neural_net_forward.1} parent=1 // pred_region
      _
    $region13: #{neural_net_forward.1} parent=1 // pred_fallthru
      _
    // Predicated region
    $region14: #{neural_net_forward.1} parent=1 // pred_check
      _
    $region15: #{neural_net_forward.1} parent=1 // pred_check_branch
      %18 = sbr.rel (0) target = $region17
    $region16: #{neural_net_forward.1} parent=1 // pred_region
      _
    $region17: #{neural_net_forward.1} parent=1 // pred_fallthru
      _
    // Predicated region
    $region18: #{neural_net_forward.1} parent=1 // pred_check
      _
    $region19: #{neural_net_forward.1} parent=1 // pred_check_branch
      %20 = sbr.rel (0) target = $region21
    $region20: #{neural_net_forward.1} parent=1 // pred_region
      _
    $region21: #{neural_net_forward.1} parent=1 // pred_fallthru
      _
    %v21 = vld [vmem:[%s0] sm:$0xff]
    %v22 = vld [vmem:[%s1] sm:$0xff]
    %v23 = vld [vmem:[%s1 + $0x8] sm:$0xff]
    %v24 = vld [vmem:[%s1 + $0x10] sm:$0xff]
    %v25 = vld [vmem:[%s1 + $0x18] sm:$0xff]
    %v26 = vld [vmem:[%s2] sm:$0x1]
    %v28 = vperm.slane %v26, 0
    %vm30 = vcmask 261120
    %v32 = vsel %vm30, %v21, 0
    %34 = vmatpush.msra.mxu0 0.0
    %35 = vmatpush.msra.mxu0 0.0
    %36 = vmatpush.msra.mxu0 0.0
    %37 = vmatpush.msra.mxu0 0.0
    %38 = vmatpush.msra.mxu0 0.0
    %39 = vmatpush.msra.mxu0 0.0
    %40 = vmatpush.msra.mxu0 0.0
    %41 = vmatpush.msra.mxu0 0.0
    %42 = vmatpush.msra.mxu0 0.0
    %43 = vmatpush.msra.mxu0 0.0
    %44 = vmatpush.msra.mxu0 0.0
    %45 = vmatpush.msra.mxu0 0.0
    %46 = vmatpush.msra.mxu0 %v25
    %47 = vmatpush.msra.mxu0 %v24
    %48 = vmatpush.msra.mxu0 %v23
    %49 = vmatpush.msra.mxu0 %v22
    %50 = vmatmul.f32.gmra.mxu0 %v32
    %v51 = vpop.f32.mrf.mxu0
    %v52 = vadd.f32 %v28, %v51
    %53 = vdwg.mxu0
    %v54 = vmax.f32 %v52, 0.0
    %v55 = vld [vmem:[%s3] sm:$0xff]
    %v56 = vld [vmem:[%s3 + $0x8] sm:$0xff]
    %v57 = vld [vmem:[%s3 + $0x10] sm:$0xff]
    %v58 = vld [vmem:[%s3 + $0x18] sm:$0xff]
    %v59 = vld [vmem:[%s3 + $0x20] sm:$0xff]
    %v60 = vld [vmem:[%s3 + $0x28] sm:$0xff]
    %v61 = vld [vmem:[%s3 + $0x30] sm:$0xff]
    %v62 = vld [vmem:[%s3 + $0x38] sm:$0xff]
    %v63 = vld [vmem:[%s3 + $0x40] sm:$0xff]
    %v64 = vld [vmem:[%s3 + $0x48] sm:$0xff]
    %v65 = vld [vmem:[%s3 + $0x50] sm:$0xff]
    %v66 = vld [vmem:[%s3 + $0x58] sm:$0xff]
    %v67 = vld [vmem:[%s3 + $0x60] sm:$0xff]
    %v68 = vld [vmem:[%s3 + $0x68] sm:$0xff]
    %v69 = vld [vmem:[%s3 + $0x70] sm:$0xff]
    %v70 = vld [vmem:[%s3 + $0x78] sm:$0xff]
    %71 = vmatpush.msra.mxu0 %v70
    %72 = vmatpush.msra.mxu0 %v69
    %73 = vmatpush.msra.mxu0 %v68
    %74 = vmatpush.msra.mxu0 %v67
    %75 = vmatpush.msra.mxu0 %v66
    %76 = vmatpush.msra.mxu0 %v65
    %77 = vmatpush.msra.mxu0 %v64
    %78 = vmatpush.msra.mxu0 %v63
    %79 = vmatpush.msra.mxu0 %v62
    %80 = vmatpush.msra.mxu0 %v61
    %81 = vmatpush.msra.mxu0 %v60
    %82 = vmatpush.msra.mxu0 %v59
    %83 = vmatpush.msra.mxu0 %v58
    %84 = vmatpush.msra.mxu0 %v57
    %85 = vmatpush.msra.mxu0 %v56
    %86 = vmatpush.msra.mxu0 %v55
    %87 = vmatmul.f32.gmra.mxu0 %v54
    %v88 = vpop.f32.mrf.mxu0
    %v89 = vadd.f32 0.0, %v88
    %90 = vdwg.mxu0
    %v91 = vld [vmem:[%s4] sm:$0x1]
    %v93 = vperm.slane %v91, 0
    %v95 = vadd.f32 %v89, %v93
    %vm96 = vcmask 31744
    %97 = vst.msk [vmem:[#allocation2] sm:$0xff] %vm96, %v95
    // Predicated region
    $region22: #{neural_net_forward.1} parent=1 // pred_check
      _
    $region23: #{neural_net_forward.1} parent=1 // pred_check_branch
      %99 = sbr.rel (0) target = $region25
    $region24: #{neural_net_forward.1} parent=1 // pred_region
      %101 = vsyncadd [#allocation3], 96
      %s102 = sshll.u32 [#allocation2], 4
      %s103 = int_to_ptr.vmem [resolvable:$true] %s102
      %s104 = sshll.u32 %s5, 4
      %s105 = int_to_ptr.hbm [resolvable:$true] %s104
      %110 = dma.vmem_to_hbm [thread:$0]  %s103, 32, %s105, [#allocation3], 32, 32, 2
    $region25: #{neural_net_forward.1} parent=1 // pred_fallthru
      _
    // Predicated region
    $region26: #{neural_net_forward.1} parent=1 // pred_check
      _
    $region27: #{neural_net_forward.1} parent=1 // pred_check_branch
      %112 = sbr.rel (0) target = $region29
    $region28: #{neural_net_forward.1} parent=1 // pred_region
      %114 = dma.done [#allocation3], 128
    $region29: #{neural_net_forward.1} parent=1 // pred_fallthru
      _
    %115 = vsyncpa [#allocation3], 1

</llo_original>
